<compile_context>
chip_gen: v7x
topology: tpu7x:2x2x1
jax: 0.10.0
libtpu: 0.0.40
codegen_flags: <defaults>
</compile_context>

<pallas_src>
import functools

import jax
import jax.numpy as jnp
from jax import lax
from jax.experimental import pallas as pl
from jax.experimental.pallas import tpu as pltpu

EPS = 1e-5  # PyTorch GroupNorm default eps


def small_block_kernel(x_ref, consts_ref, sel_ref, mmat_ref, o_ref, *,
                       nb, height, width, channels, groups, c_out):
    """Fused GroupNorm + SiLU + 3x3 same conv for a block of `nb` samples.

    x_ref:      (nb*H, W*C)        rows are (sample, y), channels fastest on lanes
    consts_ref: (G_pad+8, Lmax)    rows 0..G-1: selector^T (G, W*C);
                                   rows G_pad+{0,1,2}: gamma, beta, conv bias (tiled per lane)
    sel_ref:    (W*C, G)           one-hot group membership per lane
    mmat_ref:   (3*W*C, W*C_out)   banded conv weight matrix (bf16)
    o_ref:      (nb*H, W*C_out)    output
    """
    H = height
    WC = width * channels
    WCO = width * c_out
    G = groups
    G_pad = ((G + 7) // 8) * 8
    NbH = nb * H
    cg = channels // groups

    # ---- Unpack packed constants (static slices, no extra DMAs) ----
    selt = consts_ref[0:G, 0:WC]                       # (G, WC)
    gamma = consts_ref[G_pad + 0:G_pad + 1, 0:WC]      # (1, WC)
    beta = consts_ref[G_pad + 1:G_pad + 2, 0:WC]       # (1, WC)
    bias = consts_ref[G_pad + 2:G_pad + 3, 0:WCO]      # (1, WCO)
    sel = sel_ref[...]                                 # (WC, G)

    x2 = x_ref[...].astype(jnp.float32)                # (NbH, WC)
    x3 = x2.reshape(nb, H, WC)                         # per-sample view

    # ---- GroupNorm statistics, two-pass in f32 (no E[x^2]-E[x]^2 cancel) ----
    cnt = float(H * width * cg)
    s1 = jnp.sum(x3, axis=1)                           # (nb, WC) per-sample sum over rows
    mean_g = jnp.dot(s1, sel,
                     preferred_element_type=jnp.float32) * (1.0 / cnt)   # (nb, G)
    mean_l = jnp.dot(mean_g, selt,
                     preferred_element_type=jnp.float32)                 # (nb, WC)
    d3 = x3 - mean_l[:, None, :]                       # centered, reused for normalize
    s2 = jnp.sum(d3 * d3, axis=1)                      # (nb, WC)
    var_g = jnp.dot(s2, sel,
                    preferred_element_type=jnp.float32) * (1.0 / cnt)    # (nb, G)
    inv_g = lax.rsqrt(var_g + EPS)                     # (nb, G)
    inv_l = jnp.dot(inv_g, selt,
                    preferred_element_type=jnp.float32)                  # (nb, WC)

    # ---- Normalize + affine + SiLU (f32) ----
    scale_l = gamma * inv_l                            # (nb, WC)
    h3 = d3 * scale_l[:, None, :] + beta               # (nb, H, WC)
    h3 = h3 * jax.nn.sigmoid(h3)

    # ---- Dropout(p=0) == nn.Identity: no-op ----

    # ---- Row-shifted copies in registers (XLU rolls), no VMEM scratch ----
    h2 = h3.reshape(NbH, WC)
    hup = pltpu.roll(h2, shift=1, axis=0)              # row r <- h[r-1]
    hdn = pltpu.roll(h2, shift=NbH - 1, axis=0)        # row r <- h[r+1]
    rmod = lax.broadcasted_iota(jnp.int32, (NbH, WC), 0) % H
    hup = jnp.where(rmod == 0, 0.0, hup)               # zero y-1 halo at each sample start
    hdn = jnp.where(rmod == H - 1, 0.0, hdn)           # zero y+1 halo at each sample end

    lhs = jnp.concatenate([hup, h2, hdn], axis=-1).astype(jnp.bfloat16)  # (NbH, 3*WC)

    # ---- 3x3 conv (padding=1) as ONE bf16 MXU matmul, f32 accumulation ----
    acc = jnp.dot(lhs, mmat_ref[...], preferred_element_type=jnp.float32)  # (NbH, WCO)
    o_ref[...] = (acc + bias).astype(o_ref.dtype)


def build_conv_matrix(conv_w, W):
    """OIHW conv weight -> banded (3*W*C_in, W*C_out) matrix.

    M[r*W*C + x_in*C + ci, x*C_out + co] = w[co, ci, r, x_in - x + 1]
    when 0 <= x_in - x + 1 < 3 and 0 otherwise; the missing columns for
    x_in = -1 / x_in = W implement the left/right zero padding.
    """
    C_out, C_in, KH, KW = conv_w.shape
    w_t = jnp.transpose(conv_w, (2, 3, 1, 0))          # (kh, kw, ci, co)
    x_in = jnp.arange(W)[:, None]                      # (W, 1)
    x_out = jnp.arange(W)[None, :]                     # (1, W)
    dx = x_in - x_out + 1                              # (W, W)
    valid = (dx >= 0) & (dx < KW)
    dx_c = jnp.clip(dx, 0, KW - 1)
    w_g = w_t[:, dx_c, :, :]                           # (kh, W, W, ci, co)
    w_g = jnp.where(valid[None, :, :, None, None], w_g, 0.0)
    m = jnp.transpose(w_g, (0, 1, 3, 2, 4))            # (kh, x_in, ci, x_out, co)
    return m.reshape(KH * W * C_in, W * C_out)


def small_block_forward(x_nchw, gamma, beta, conv_w, conv_b, *, groups):
    """Wrapper: NCHW in -> NCHW out (matching the PyTorch module)."""
    N, C, H, W = x_nchw.shape
    C_out = conv_w.shape[0]
    G = groups
    G_pad = ((G + 7) // 8) * 8
    WC = W * C
    WCO = W * C_out
    Lmax = max(WC, WCO)

    # Samples per grid step: target ~256 conv-matmul rows per step, balanced
    # across blocks; trailing partial block handled via zero padding.
    nb_max = max(1, min(N, max(1, 256 // H)))
    n_blocks = -(-N // nb_max)
    nb = -(-N // n_blocks)
    Np = n_blocks * nb

    # NCHW -> (N*H, W*C): channel fastest along the lane axis, rows = (n, y).
    x_lane = jnp.transpose(x_nchw, (0, 2, 3, 1)).reshape(N * H, WC)
    if Np != N:
        x_lane = jnp.pad(x_lane, ((0, (Np - N) * H), (0, 0)))

    # One-hot group membership per lane (lane l -> x = l // C, channel = l % C).
    grp = (jnp.arange(WC) % C) // (C // G)
    sel = (grp[:, None] == jnp.arange(G)[None, :]).astype(jnp.float32)  # (WC, G)

    # Packed constants: selector^T + per-lane gamma / beta / conv bias.
    consts = jnp.zeros((G_pad + 8, Lmax), jnp.float32)
    consts = consts.at[0:G, 0:WC].set(jnp.transpose(sel))
    consts = consts.at[G_pad + 0, 0:WC].set(jnp.tile(gamma.astype(jnp.float32), W))
    consts = consts.at[G_pad + 1, 0:WC].set(jnp.tile(beta.astype(jnp.float32), W))
    consts = consts.at[G_pad + 2, 0:WCO].set(jnp.tile(conv_b.astype(jnp.float32), W))

    # Banded conv weight matrix, bf16 for the MXU.
    mmat = build_conv_matrix(conv_w, W).astype(jnp.bfloat16)            # (3*WC, WCO)

    out_lane = pl.pallas_call(
        functools.partial(small_block_kernel, nb=nb, height=H, width=W,
                          channels=C, groups=G, c_out=C_out),
        out_shape=jax.ShapeDtypeStruct((Np * H, WCO), x_nchw.dtype),
        grid_spec=pltpu.PrefetchScalarGridSpec(
            num_scalar_prefetch=0,
            grid=(n_blocks,),
            in_specs=[
                pl.BlockSpec((nb * H, WC), lambda i: (i, 0)),        # x block
                pl.BlockSpec((G_pad + 8, Lmax), lambda i: (0, 0)),   # packed constants
                pl.BlockSpec((WC, G), lambda i: (0, 0)),             # group selector
                pl.BlockSpec((3 * WC, WCO), lambda i: (0, 0)),       # conv matrix
            ],
            out_specs=pl.BlockSpec((nb * H, WCO), lambda i: (i, 0)),
        ),
        compiler_params=pltpu.CompilerParams(
            dimension_semantics=("parallel",),
            vmem_limit_bytes=32 * 1024 * 1024,   # safe on v7x's 64 MiB VMEM too
        ),
    )(x_lane, consts, sel, mmat)

    out = out_lane[:N * H].reshape(N, H, W, C_out)
    return jnp.transpose(out, (0, 3, 1, 2))            # NHWC -> NCHW


def ref_forward(x, gamma, beta, conv_w, conv_b, *, groups):
    """Plain-JAX f32 reference (mirrors the PyTorch module)."""
    N, C, H, W = x.shape
    xg = x.reshape(N, groups, -1)
    mean = xg.mean(axis=-1, keepdims=True)
    var = ((xg - mean) ** 2).mean(axis=-1, keepdims=True)
    xn = ((xg - mean) / jnp.sqrt(var + EPS)).reshape(N, C, H, W)
    h = xn * gamma[None, :, None, None] + beta[None, :, None, None]
    h = h * jax.nn.sigmoid(h)
    out = jax.lax.conv_general_dilated(
        h, conv_w, window_strides=(1, 1), padding=((1, 1), (1, 1)),
        dimension_numbers=("NCHW", "OIHW", "NCHW"))
    return out + conv_b[None, :, None, None]


if __name__ == "__main__":
    # smallBlock(dim=8, dim_out=8, groups=4, dropout=0)
    N, C, H, W = 2, 8, 16, 16
    C_OUT, GROUPS = 8, 4

    key = jax.random.PRNGKey(0)
    kx, kw, kb, kg, kbe = jax.random.split(key, 5)

    x = jax.random.normal(kx, (N, C, H, W), dtype=jnp.float32)

    # GroupNorm affine params (randomized around default init).
    gamma = 1.0 + 0.1 * jax.random.normal(kg, (C,), dtype=jnp.float32)
    beta = 0.1 * jax.random.normal(kbe, (C,), dtype=jnp.float32)

    # Conv2d params (uniform within +-1/sqrt(fan_in), like PyTorch default).
    fan_in = C * 3 * 3
    bound = 1.0 / (fan_in ** 0.5)
    conv_w = jax.random.uniform(kw, (C_OUT, C, 3, 3), jnp.float32,
                                minval=-bound, maxval=bound)
    conv_b = jax.random.uniform(kb, (C_OUT,), jnp.float32,
                                minval=-bound, maxval=bound)

    out = small_block_forward(x, gamma, beta, conv_w, conv_b, groups=GROUPS)
    out = jax.block_until_ready(out)

    ref = ref_forward(x, gamma, beta, conv_w, conv_b, groups=GROUPS)
    assert out.shape == (N, C_OUT, H, W)
    # Conv matmul runs with bf16 inputs (f32 accumulation), so compare with a
    # bf16-appropriate tolerance against the f32 reference.
    max_err = float(jnp.max(jnp.abs(out - ref)))
    assert jnp.allclose(out, ref, atol=5e-2, rtol=5e-2), max_err

    print("KERNEL_OK")
</pallas_src>

<mosaic_0001>
module attributes {stable_mosaic.version = 11 : i64} {
  func.func @small_block_kernel(%arg0: i32, %arg1: memref<32x128xf32, #tpu.memory_space<vmem>>, %arg2: memref<16x128xf32, #tpu.memory_space<vmem>>, %arg3: memref<128x4xf32, #tpu.memory_space<vmem>>, %arg4: memref<384x128xbf16, #tpu.memory_space<vmem>>, %arg5: memref<32x128xf32, #tpu.memory_space<vmem>>) attributes {dimension_semantics = [#tpu.dimension_semantics<parallel>], iteration_bounds = array<i64: 1>, scalar_prefetch = 0 : i64, scratch_operands = 0 : i64, tpu.core_type = #tpu.core_type<tc>, window_params = [{transform_indices = @transform_0, window_bounds = array<i64: 32, 128>}, {pipeline_mode = #tpu.pipeline_mode<synchronous>, transform_indices = @transform_1, window_bounds = array<i64: 16, 128>}, {pipeline_mode = #tpu.pipeline_mode<synchronous>, transform_indices = @transform_2, window_bounds = array<i64: 128, 4>}, {pipeline_mode = #tpu.pipeline_mode<synchronous>, transform_indices = @transform_3, window_bounds = array<i64: 384, 128>}, {transform_indices = @transform_4, window_bounds = array<i64: 32, 128>}]} {
    %c0 = arith.constant 0 : index
    %c0_0 = arith.constant 0 : index
    %0 = vector.load %arg2[%c0, %c0_0] : memref<16x128xf32, #tpu.memory_space<vmem>>, vector<4x128xf32>
    %c8 = arith.constant 8 : index
    %c0_1 = arith.constant 0 : index
    %1 = vector.load %arg2[%c8, %c0_1] : memref<16x128xf32, #tpu.memory_space<vmem>>, vector<1x128xf32>
    %c9 = arith.constant 9 : index
    %c0_2 = arith.constant 0 : index
    %2 = vector.load %arg2[%c9, %c0_2] : memref<16x128xf32, #tpu.memory_space<vmem>>, vector<1x128xf32>
    %c10 = arith.constant 10 : index
    %c0_3 = arith.constant 0 : index
    %3 = vector.load %arg2[%c10, %c0_3] : memref<16x128xf32, #tpu.memory_space<vmem>>, vector<1x128xf32>
    %c0_4 = arith.constant 0 : index
    %c0_5 = arith.constant 0 : index
    %4 = vector.load %arg3[%c0_4, %c0_5] : memref<128x4xf32, #tpu.memory_space<vmem>>, vector<128x4xf32>
    %c0_6 = arith.constant 0 : index
    %c0_7 = arith.constant 0 : index
    %5 = vector.load %arg1[%c0_6, %c0_7] : memref<32x128xf32, #tpu.memory_space<vmem>>, vector<32x128xf32>
    %6 = vector.shape_cast %5 : vector<32x128xf32> to vector<2x16x128xf32>
    %cst = arith.constant dense<0.000000e+00> : vector<2x128xf32>
    %7 = vector.multi_reduction <add>, %6, %cst [1] : vector<2x16x128xf32> to vector<2x128xf32>
    %cst_8 = arith.constant dense<0.000000e+00> : vector<2x4xf32>
    %8 = tpu.matmul %7, %4, %cst_8 {dimension_numbers = #tpu.dot_dimension_numbers<[1], [0], [0], [1], [0, 0, 1, 1], [], []>} : vector<2x128xf32>, vector<128x4xf32>, vector<2x4xf32> -> vector<2x4xf32>
    %cst_9 = arith.constant 0.001953125 : f32
    %9 = vector.broadcast %cst_9 : f32 to vector<2x4xf32>
    %10 = arith.mulf %8, %9 : vector<2x4xf32>
    %cst_10 = arith.constant dense<0.000000e+00> : vector<2x128xf32>
    %11 = tpu.matmul %10, %0, %cst_10 {dimension_numbers = #tpu.dot_dimension_numbers<[1], [0], [0], [1], [0, 0, 1, 1], [], []>} : vector<2x4xf32>, vector<4x128xf32>, vector<2x128xf32> -> vector<2x128xf32>
    %12 = vector.shape_cast %11 : vector<2x128xf32> to vector<2x1x128xf32>
    %13 = vector.broadcast %12 : vector<2x1x128xf32> to vector<2x16x128xf32>
    %14 = arith.subf %6, %13 : vector<2x16x128xf32>
    %15 = arith.mulf %14, %14 : vector<2x16x128xf32>
    %cst_11 = arith.constant dense<0.000000e+00> : vector<2x128xf32>
    %16 = vector.multi_reduction <add>, %15, %cst_11 [1] : vector<2x16x128xf32> to vector<2x128xf32>
    %cst_12 = arith.constant dense<0.000000e+00> : vector<2x4xf32>
    %17 = tpu.matmul %16, %4, %cst_12 {dimension_numbers = #tpu.dot_dimension_numbers<[1], [0], [0], [1], [0, 0, 1, 1], [], []>} : vector<2x128xf32>, vector<128x4xf32>, vector<2x4xf32> -> vector<2x4xf32>
    %cst_13 = arith.constant 0.001953125 : f32
    %18 = vector.broadcast %cst_13 : f32 to vector<2x4xf32>
    %19 = arith.mulf %17, %18 : vector<2x4xf32>
    %cst_14 = arith.constant 9.99999974E-6 : f32
    %20 = vector.broadcast %cst_14 : f32 to vector<2x4xf32>
    %21 = arith.addf %19, %20 : vector<2x4xf32>
    %22 = math.rsqrt %21 : vector<2x4xf32>
    %cst_15 = arith.constant dense<0.000000e+00> : vector<2x128xf32>
    %23 = tpu.matmul %22, %0, %cst_15 {dimension_numbers = #tpu.dot_dimension_numbers<[1], [0], [0], [1], [0, 0, 1, 1], [], []>} : vector<2x4xf32>, vector<4x128xf32>, vector<2x128xf32> -> vector<2x128xf32>
    %24 = vector.broadcast %1 : vector<1x128xf32> to vector<2x128xf32>
    %25 = arith.mulf %24, %23 : vector<2x128xf32>
    %26 = vector.shape_cast %25 : vector<2x128xf32> to vector<2x1x128xf32>
    %27 = vector.broadcast %26 : vector<2x1x128xf32> to vector<2x16x128xf32>
    %28 = arith.mulf %14, %27 : vector<2x16x128xf32>
    %29 = vector.shape_cast %2 : vector<1x128xf32> to vector<1x1x128xf32>
    %30 = vector.broadcast %29 : vector<1x1x128xf32> to vector<2x16x128xf32>
    %31 = arith.addf %28, %30 : vector<2x16x128xf32>
    %32 = arith.negf %31 : vector<2x16x128xf32>
    %33 = math.exp %32 : vector<2x16x128xf32>
    %cst_16 = arith.constant 1.000000e+00 : f32
    %34 = vector.broadcast %cst_16 : f32 to vector<2x16x128xf32>
    %35 = arith.addf %34, %33 : vector<2x16x128xf32>
    %36 = arith.divf %34, %35 : vector<2x16x128xf32>
    %37 = arith.mulf %31, %36 : vector<2x16x128xf32>
    %38 = vector.shape_cast %37 : vector<2x16x128xf32> to vector<32x128xf32>
    %c1_i32 = arith.constant 1 : i32
    %39 = tpu.dynamic_rotate %38 by %c1_i32 dim 0 : vector<32x128xf32>, i32 -> vector<32x128xf32>
    %c31_i32 = arith.constant 31 : i32
    %40 = tpu.dynamic_rotate %38 by %c31_i32 dim 0 : vector<32x128xf32>, i32 -> vector<32x128xf32>
    %41 = tpu.iota {dimensions = array<i32: 0>} : vector<32x128xi32>
    %c16_i32 = arith.constant 16 : i32
    %c0_i32 = arith.constant 0 : i32
    %42 = arith.cmpi eq, %c16_i32, %c0_i32 : i32
    %c1_i32_17 = arith.constant 1 : i32
    %43 = arith.select %42, %c1_i32_17, %c16_i32 : i32
    %44 = vector.broadcast %43 : i32 to vector<32x128xi32>
    %45 = arith.remsi %41, %44 : vector<32x128xi32>
    %c0_i32_18 = arith.constant 0 : i32
    %46 = vector.broadcast %c0_i32_18 : i32 to vector<32x128xi32>
    %47 = arith.cmpi ne, %45, %46 : vector<32x128xi32>
    %c0_i32_19 = arith.constant 0 : i32
    %48 = vector.broadcast %c0_i32_19 : i32 to vector<32x128xi32>
    %49 = arith.cmpi slt, %45, %48 : vector<32x128xi32>
    %c0_i32_20 = arith.constant 0 : i32
    %50 = arith.cmpi slt, %43, %c0_i32_20 : i32
    %51 = vector.broadcast %50 : i1 to vector<32x128xi1>
    %52 = vector.broadcast %51 : vector<32x128xi1> to vector<32x128xi1>
    %53 = arith.xori %49, %52 : vector<32x128xi1>
    %54 = arith.andi %53, %47 : vector<32x128xi1>
    %55 = vector.broadcast %43 : i32 to vector<32x128xi32>
    %56 = arith.addi %45, %55 : vector<32x128xi32>
    %57 = arith.select %54, %56, %45 : vector<32x128xi1>, vector<32x128xi32>
    %c0_i32_21 = arith.constant 0 : i32
    %58 = vector.broadcast %c0_i32_21 : i32 to vector<32x128xi32>
    %59 = arith.cmpi eq, %57, %58 : vector<32x128xi32>
    %cst_22 = arith.constant 0.000000e+00 : f32
    %60 = vector.broadcast %cst_22 : f32 to vector<32x128xf32>
    %61 = arith.select %59, %60, %39 : vector<32x128xi1>, vector<32x128xf32>
    %c15_i32 = arith.constant 15 : i32
    %62 = vector.broadcast %c15_i32 : i32 to vector<32x128xi32>
    %63 = arith.cmpi eq, %57, %62 : vector<32x128xi32>
    %cst_23 = arith.constant 0.000000e+00 : f32
    %64 = vector.broadcast %cst_23 : f32 to vector<32x128xf32>
    %65 = arith.select %63, %64, %40 : vector<32x128xi1>, vector<32x128xf32>
    %66 = tpu.concatenate %61, %38, %65 in 1 : vector<32x128xf32>, vector<32x128xf32>, vector<32x128xf32> -> vector<32x384xf32>
    %67 = arith.truncf %66 : vector<32x384xf32> to vector<32x384xbf16>
    %c0_24 = arith.constant 0 : index
    %c0_25 = arith.constant 0 : index
    %68 = vector.load %arg4[%c0_24, %c0_25] : memref<384x128xbf16, #tpu.memory_space<vmem>>, vector<384x128xbf16>
    %cst_26 = arith.constant dense<0.000000e+00> : vector<32x128xf32>
    %69 = tpu.matmul %67, %68, %cst_26 {dimension_numbers = #tpu.dot_dimension_numbers<[1], [0], [0], [1], [0, 0, 1, 1], [], []>} : vector<32x384xbf16>, vector<384x128xbf16>, vector<32x128xf32> -> vector<32x128xf32>
    %70 = vector.broadcast %3 : vector<1x128xf32> to vector<32x128xf32>
    %71 = arith.addf %69, %70 : vector<32x128xf32>
    %c0_27 = arith.constant 0 : index
    %c0_28 = arith.constant 0 : index
    %72 = vector.load %arg5[%c0_27, %c0_28] : memref<32x128xf32, #tpu.memory_space<vmem>>, vector<32x128xf32>
    tpu.vector_store %arg5[%c0_27, %c0_28], %71 {strides = array<i32>} : memref<32x128xf32, #tpu.memory_space<vmem>>, vector<32x128xf32>,
    return
  }
  func.func @transform_0(%arg0: i32) -> (i32, i32) {
    %c0_i32 = arith.constant 0 : i32
    %c0_i32_0 = arith.constant 0 : i32
    return %arg0, %c0_i32 : i32, i32
  }
  func.func @transform_1(%arg0: i32) -> (i32, i32) {
    %c0_i32 = arith.constant 0 : i32
    %c0_i32_0 = arith.constant 0 : i32
    %c0_i32_1 = arith.constant 0 : i32
    return %c0_i32, %c0_i32_0 : i32, i32
  }
  func.func @transform_2(%arg0: i32) -> (i32, i32) {
    %c0_i32 = arith.constant 0 : i32
    %c0_i32_0 = arith.constant 0 : i32
    %c0_i32_1 = arith.constant 0 : i32
    return %c0_i32, %c0_i32_0 : i32, i32
  }
  func.func @transform_3(%arg0: i32) -> (i32, i32) {
    %c0_i32 = arith.constant 0 : i32
    %c0_i32_0 = arith.constant 0 : i32
    %c0_i32_1 = arith.constant 0 : i32
    return %c0_i32, %c0_i32_0 : i32, i32
  }
  func.func @transform_4(%arg0: i32) -> (i32, i32) {
    %c0_i32 = arith.constant 0 : i32
    %c0_i32_0 = arith.constant 0 : i32
    return %arg0, %c0_i32 : i32, i32
  }
}

</mosaic_0001>

<llo_original>
// kernel: tpu_custom_call.1
$region0: #{tpu_custom_call.1}
  #allocation0 [shape = 'u32[]', space=smem, size = 0x4, offset = 0x4, fixed_abs, tag = 'smem constant byte address 0x4 - core index']
  #allocation1 [shape = 'u32[144,128]{1,0:T(1,128)}', space=vmem, size = 0x12000, scoped, tag = 'internal scratch']
  %s0 = inlined_call_operand.vmem [shape: f32[32,128], index: 0, kind: input, shape index: {}]
  %s1 = inlined_call_operand.vmem [shape: f32[16,128], index: 1, kind: input, shape index: {}]
  %s2 = inlined_call_operand.vmem [shape: f32[128,4], index: 2, kind: input, shape index: {}]
  %s3 = inlined_call_operand.hbm [shape: bf16[384,128], index: 3, kind: input, shape index: {}]
  %s4 = inlined_call_operand.hbm [shape: f32[32,128], index: 4, kind: output, shape index: {}]
  %s5 = sld [smem:[#allocation0]]
  $region30: #{tpu_custom_call.1} parent=0
    _
  %s7 = ssub.s32 1, %s5
  %s8 = scalar_select 0, %s7, %s5
  $region1: #{tpu_custom_call.1} parent=0
    #allocation2 [shape = 'u8[98304]{0}', space=vmem, size = 0x18000, scoped, tag = 'input window, operand 3, single buffered']
    #allocation3 [shape = 's32[1]{0}', space=sflag, size = 0x4, scoped, tag = 'scoped memory for tpu_custom_call.1']
    #allocation4 [shape = 's32[1]{0}', space=sflag, size = 0x4, scoped, tag = 'scoped memory for tpu_custom_call.1']
    #allocation5 [shape = 'u8[16384]{0}', space=vmem, size = 0x4000, scoped, tag = 'output window, operand 0, single buffered']
    %9 = vsyncpa [#allocation3], 0
    %10 = vsyncpa [#allocation4], 0
    // Predicated region
    $region2: #{tpu_custom_call.1} parent=1 // pred_check
      _
    $region3: #{tpu_custom_call.1} parent=1 // pred_check_branch
      %12 = sbr.rel (0) target = $region5
    $region4: #{tpu_custom_call.1} parent=1 // pred_region
      _
    $region5: #{tpu_custom_call.1} parent=1 // pred_fallthru
      _
    // Predicated region
    $region6: #{tpu_custom_call.1} parent=1 // pred_check
      _
    $region7: #{tpu_custom_call.1} parent=1 // pred_check_branch
      %14 = sbr.rel (0) target = $region9
    $region8: #{tpu_custom_call.1} parent=1 // pred_region
      _
    $region9: #{tpu_custom_call.1} parent=1 // pred_fallthru
      _
    // Predicated region
    $region10: #{tpu_custom_call.1} parent=1 // pred_check
      _
    $region11: #{tpu_custom_call.1} parent=1 // pred_check_branch
      %16 = sbr.rel (0) target = $region13
    $region12: #{tpu_custom_call.1} parent=1 // pred_region
      _
    $region13: #{tpu_custom_call.1} parent=1 // pred_fallthru
      _
    // Predicated region
    $region14: #{tpu_custom_call.1} parent=1 // pred_check
      _
    $region15: #{tpu_custom_call.1} parent=1 // pred_check_branch
      %18 = sbr.rel (0) target = $region17
    $region16: #{tpu_custom_call.1} parent=1 // pred_region
      %s20 = ssub.s32 3072, 3072
      %21 = vsyncadd [#allocation3], %s20
      %s22 = sshll.u32 [#allocation2], 4
      %s23 = int_to_ptr.vmem [resolvable:$true] %s22
      %28 = dma.hbm_to_vmem [thread:$0]  %s3, 3072, %s23, [#allocation3], 64, 64, 4
    $region17: #{tpu_custom_call.1} parent=1 // pred_fallthru
      _
    // Predicated region
    $region18: #{tpu_custom_call.1} parent=1 // pred_check
      _
    $region19: #{tpu_custom_call.1} parent=1 // pred_check_branch
      %30 = sbr.rel (0) target = $region21
    $region20: #{tpu_custom_call.1} parent=1 // pred_region
      %31 = dma.done [#allocation3], 3072
    $region21: #{tpu_custom_call.1} parent=1 // pred_fallthru
      _
    %v33 = vld [vmem:[%s1] sm:$0xf]
    %v34 = vld [vmem:[%s1 + $0x8] sm:$0x1]
    %v35 = vld [vmem:[%s1 + $0x9] sm:$0x1]
    %v36 = vld [vmem:[%s1 + $0xa] sm:$0x1]
    %v37 = vld [vmem:[%s2] sm:$0xff]
    %v38 = vld [vmem:[%s2 + $0x8] sm:$0xff]
    %v39 = vld [vmem:[%s2 + $0x10] sm:$0xff]
    %v40 = vld [vmem:[%s2 + $0x18] sm:$0xff]
    %v41 = vld [vmem:[%s2 + $0x20] sm:$0xff]
    %v42 = vld [vmem:[%s2 + $0x28] sm:$0xff]
    %v43 = vld [vmem:[%s2 + $0x30] sm:$0xff]
    %v44 = vld [vmem:[%s2 + $0x38] sm:$0xff]
    %v45 = vld [vmem:[%s2 + $0x40] sm:$0xff]
    %v46 = vld [vmem:[%s2 + $0x48] sm:$0xff]
    %v47 = vld [vmem:[%s2 + $0x50] sm:$0xff]
    %v48 = vld [vmem:[%s2 + $0x58] sm:$0xff]
    %v49 = vld [vmem:[%s2 + $0x60] sm:$0xff]
    %v50 = vld [vmem:[%s2 + $0x68] sm:$0xff]
    %v51 = vld [vmem:[%s2 + $0x70] sm:$0xff]
    %v52 = vld [vmem:[%s2 + $0x78] sm:$0xff]
    %v53 = vld [vmem:[%s0] sm:$0xff]
    %v54 = vld [vmem:[%s0 + $0x8] sm:$0xff]
    %v55 = vld [vmem:[%s0 + $0x10] sm:$0xff]
    %v56 = vld [vmem:[%s0 + $0x18] sm:$0xff]
    %v57 = vadd.f32 %v53, %v54
    %v58 = vrot.slane %v57, 4
    %v59 = vadd.f32 %v57, %v58
    %v60 = vrot.slane %v59, 2
    %v61 = vadd.f32 %v59, %v60
    %v62 = vrot.slane %v61, 1
    %v63 = vadd.f32 %v61, %v62
    %v64 = vadd.f32 %v55, %v56
    %v65 = vrot.slane %v64, 4
    %v66 = vadd.f32 %v64, %v65
    %v67 = vrot.slane %v66, 2
    %v68 = vadd.f32 %v66, %v67
    %v69 = vrot.slane %v68, 1
    %v70 = vadd.f32 %v68, %v69
    %vm73 = vcmask 1041409
    %v74 = vsel %vm73, %v70, %v63
    %76 = vmatprep.subr.mxu0 0.0
    %77 = vmatpush1.msra.mxu0 %v37
    %78 = vmatprep.subr.mxu0 0.0
    %79 = vmatpush1.msra.mxu0 %v38
    %80 = vmatprep.subr.mxu0 0.0
    %81 = vmatpush1.msra.mxu0 %v39
    %82 = vmatprep.subr.mxu0 0.0
    %83 = vmatpush1.msra.mxu0 %v40
    %84 = vmatprep.subr.mxu0 0.0
    %85 = vmatpush1.msra.mxu0 %v41
    %86 = vmatprep.subr.mxu0 0.0
    %87 = vmatpush1.msra.mxu0 %v42
    %88 = vmatprep.subr.mxu0 0.0
    %89 = vmatpush1.msra.mxu0 %v43
    %90 = vmatprep.subr.mxu0 0.0
    %91 = vmatpush1.msra.mxu0 %v44
    %92 = vmatprep.subr.mxu0 0.0
    %93 = vmatpush1.msra.mxu0 %v45
    %94 = vmatprep.subr.mxu0 0.0
    %95 = vmatpush1.msra.mxu0 %v46
    %96 = vmatprep.subr.mxu0 0.0
    %97 = vmatpush1.msra.mxu0 %v47
    %98 = vmatprep.subr.mxu0 0.0
    %99 = vmatpush1.msra.mxu0 %v48
    %100 = vmatprep.subr.mxu0 0.0
    %101 = vmatpush1.msra.mxu0 %v49
    %102 = vmatprep.subr.mxu0 0.0
    %103 = vmatpush1.msra.mxu0 %v50
    %104 = vmatprep.subr.mxu0 0.0
    %105 = vmatpush1.msra.mxu0 %v51
    %106 = vmatprep.subr.mxu0 0.0
    %107 = vmatpush1.msra.mxu0 %v52
    %108 = vmatprep.subr.mxu0 0.0
    %109 = vmatpush1.msra.mxu0 0.0
    %110 = vmatprep.subr.mxu0 0.0
    %111 = vmatpush1.msra.mxu0 0.0
    %112 = vmatprep.subr.mxu0 0.0
    %113 = vmatpush1.msra.mxu0 0.0
    %114 = vmatprep.subr.mxu0 0.0
    %115 = vmatpush1.msra.mxu0 0.0
    %116 = vmatprep.subr.mxu0 0.0
    %117 = vmatpush1.msra.mxu0 0.0
    %118 = vmatprep.subr.mxu0 0.0
    %119 = vmatpush1.msra.mxu0 0.0
    %120 = vmatprep.subr.mxu0 0.0
    %121 = vmatpush1.msra.mxu0 0.0
    %122 = vmatprep.subr.mxu0 0.0
    %123 = vmatpush1.msra.mxu0 0.0
    %124 = vmatprep.subr.mxu0 0.0
    %125 = vmatpush1.msra.mxu0 0.0
    %126 = vmatprep.subr.mxu0 0.0
    %127 = vmatpush1.msra.mxu0 0.0
    %128 = vmatprep.subr.mxu0 0.0
    %129 = vmatpush1.msra.mxu0 0.0
    %130 = vmatprep.subr.mxu0 0.0
    %131 = vmatpush1.msra.mxu0 0.0
    %132 = vmatprep.subr.mxu0 0.0
    %133 = vmatpush1.msra.mxu0 0.0
    %134 = vmatprep.subr.mxu0 0.0
    %135 = vmatpush1.msra.mxu0 0.0
    %136 = vmatprep.subr.mxu0 0.0
    %137 = vmatpush1.msra.mxu0 0.0
    %138 = vmatprep.subr.mxu0 0.0
    %139 = vmatpush1.msra.mxu0 0.0
    %140 = vmatprep.mubr.f32.mxu0 0.0
    %141 = vmatmul.mubr.f32.gmra.mrb[0].mxu0 %v74
    %v142 = vpop.f32.mrb[0].mxu0
    %v143 = vadd.f32 0.0, %v142
    %v144 = vpop.f32.mrb[0].mxu0
    %145 = vdwg.mxu0
    %v146 = vmul.f32 %v143, 0.001953125
    %vm147 = vcmask 31744
    %v149 = vsel %vm147, %v146, 0
    %vm151 = vcmask 1043456
    %v153 = vsel %vm151, %v33, 0
    %155 = vmatprep.subr.mxu0 0.0
    %156 = vmatpush1.msra.mxu0 %v153
    %157 = vmatprep.subr.mxu0 0.0
    %158 = vmatpush1.msra.mxu0 0.0
    %159 = vmatprep.subr.mxu0 0.0
    %160 = vmatpush1.msra.mxu0 0.0
    %161 = vmatprep.subr.mxu0 0.0
    %162 = vmatpush1.msra.mxu0 0.0
    %163 = vmatprep.subr.mxu0 0.0
    %164 = vmatpush1.msra.mxu0 0.0
    %165 = vmatprep.subr.mxu0 0.0
    %166 = vmatpush1.msra.mxu0 0.0
    %167 = vmatprep.subr.mxu0 0.0
    %168 = vmatpush1.msra.mxu0 0.0
    %169 = vmatprep.subr.mxu0 0.0
    %170 = vmatpush1.msra.mxu0 0.0
    %171 = vmatprep.subr.mxu0 0.0
    %172 = vmatpush1.msra.mxu0 0.0
    %173 = vmatprep.subr.mxu0 0.0
    %174 = vmatpush1.msra.mxu0 0.0
    %175 = vmatprep.subr.mxu0 0.0
    %176 = vmatpush1.msra.mxu0 0.0
    %177 = vmatprep.subr.mxu0 0.0
    %178 = vmatpush1.msra.mxu0 0.0
    %179 = vmatprep.subr.mxu0 0.0
    %180 = vmatpush1.msra.mxu0 0.0
    %181 = vmatprep.subr.mxu0 0.0
    %182 = vmatpush1.msra.mxu0 0.0
    %183 = vmatprep.subr.mxu0 0.0
    %184 = vmatpush1.msra.mxu0 0.0
    %185 = vmatprep.subr.mxu0 0.0
    %186 = vmatpush1.msra.mxu0 0.0
    %187 = vmatprep.subr.mxu0 0.0
    %188 = vmatpush1.msra.mxu0 0.0
    %189 = vmatprep.subr.mxu0 0.0
    %190 = vmatpush1.msra.mxu0 0.0
    %191 = vmatprep.subr.mxu0 0.0
    %192 = vmatpush1.msra.mxu0 0.0
    %193 = vmatprep.subr.mxu0 0.0
    %194 = vmatpush1.msra.mxu0 0.0
    %195 = vmatprep.subr.mxu0 0.0
    %196 = vmatpush1.msra.mxu0 0.0
    %197 = vmatprep.subr.mxu0 0.0
    %198 = vmatpush1.msra.mxu0 0.0
    %199 = vmatprep.subr.mxu0 0.0
    %200 = vmatpush1.msra.mxu0 0.0
    %201 = vmatprep.subr.mxu0 0.0
    %202 = vmatpush1.msra.mxu0 0.0
    %203 = vmatprep.subr.mxu0 0.0
    %204 = vmatpush1.msra.mxu0 0.0
    %205 = vmatprep.subr.mxu0 0.0
    %206 = vmatpush1.msra.mxu0 0.0
    %207 = vmatprep.subr.mxu0 0.0
    %208 = vmatpush1.msra.mxu0 0.0
    %209 = vmatprep.subr.mxu0 0.0
    %210 = vmatpush1.msra.mxu0 0.0
    %211 = vmatprep.subr.mxu0 0.0
    %212 = vmatpush1.msra.mxu0 0.0
    %213 = vmatprep.subr.mxu0 0.0
    %214 = vmatpush1.msra.mxu0 0.0
    %215 = vmatprep.subr.mxu0 0.0
    %216 = vmatpush1.msra.mxu0 0.0
    %217 = vmatprep.subr.mxu0 0.0
    %218 = vmatpush1.msra.mxu0 0.0
    %219 = vmatprep.mubr.f32.mxu0 0.0
    %220 = vmatmul.mubr.f32.gmra.mrb[0].mxu0 %v149
    %v221 = vpop.f32.mrb[0].mxu0
    %v222 = vadd.f32 0.0, %v221
    %v223 = vpop.f32.mrb[0].mxu0
    %224 = vdwg.mxu0
    %v227 = vunpack.c.l.s4 1966171168
    %v228 = vunpack.c.0.s8 %v227
    %v229 = vlaneseq
    %v230 = vshrl.u32 %v229, 7
    %v231 = vsub.s32 %v228, %v230
    %v232 = vrot.slane %v222, %v231
    %v233 = vcombine.high %v232, %v232
    %v235 = vunpack.c.l.s4 1966171168
    %v236 = vunpack.c.0.s8 %v235
    %v237 = vlaneseq
    %v238 = vshrl.u32 %v237, 7
    %v239 = vsub.s32 %v236, %v238
    %v240 = vrot.slane %v232, %v239
    %v242 = vunpack.c.l.s4 1966171168
    %v243 = vunpack.c.0.s8 %v242
    %v244 = vlaneseq
    %v245 = vshrl.u32 %v244, 7
    %v246 = vsub.s32 %v243, %v245
    %v247 = vrot.slane %v233, %v246
    %v248 = vlaneseq
    %v249 = vshrl.u32 %v248, 7
    %v250 = vsub.s32 0, %v249
    %v251 = vrot.slane %v240, %v250
    %v252 = vlaneseq
    %v253 = vshrl.u32 %v252, 7
    %v254 = vsub.s32 0, %v253
    %v255 = vrot.slane %v247, %v254
    %v258 = vsub.f32 %v53, %v251
    %v259 = vsub.f32 %v54, %v251
    %v260 = vsub.f32 %v55, %v255
    %v261 = vsub.f32 %v56, %v255
    %v262 = vmul.f32 %v258, %v258
    %v263 = vmul.f32 %v259, %v259
    %v264 = vmul.f32 %v260, %v260
    %v265 = vmul.f32 %v261, %v261
    %v266 = vadd.f32 %v262, %v263
    %v267 = vrot.slane %v266, 4
    %v268 = vadd.f32 %v266, %v267
    %v269 = vrot.slane %v268, 2
    %v270 = vadd.f32 %v268, %v269
    %v271 = vrot.slane %v270, 1
    %v272 = vadd.f32 %v270, %v271
    %v273 = vadd.f32 %v264, %v265
    %v274 = vrot.slane %v273, 4
    %v275 = vadd.f32 %v273, %v274
    %v276 = vrot.slane %v275, 2
    %v277 = vadd.f32 %v275, %v276
    %v278 = vrot.slane %v277, 1
    %v279 = vadd.f32 %v277, %v278
    %v282 = vsel %vm73, %v279, %v272
    %284 = vmatprep.subr.mxu0 0.0
    %285 = vmatpush1.msra.mxu0 %v37
    %286 = vmatprep.subr.mxu0 0.0
    %287 = vmatpush1.msra.mxu0 %v38
    %288 = vmatprep.subr.mxu0 0.0
    %289 = vmatpush1.msra.mxu0 %v39
    %290 = vmatprep.subr.mxu0 0.0
    %291 = vmatpush1.msra.mxu0 %v40
    %292 = vmatprep.subr.mxu0 0.0
    %293 = vmatpush1.msra.mxu0 %v41
    %294 = vmatprep.subr.mxu0 0.0
    %295 = vmatpush1.msra.mxu0 %v42
    %296 = vmatprep.subr.mxu0 0.0
    %297 = vmatpush1.msra.mxu0 %v43
    %298 = vmatprep.subr.mxu0 0.0
    %299 = vmatpush1.msra.mxu0 %v44
    %300 = vmatprep.subr.mxu0 0.0
    %301 = vmatpush1.msra.mxu0 %v45
    %302 = vmatprep.subr.mxu0 0.0
    %303 = vmatpush1.msra.mxu0 %v46
    %304 = vmatprep.subr.mxu0 0.0
    %305 = vmatpush1.msra.mxu0 %v47
    %306 = vmatprep.subr.mxu0 0.0
    %307 = vmatpush1.msra.mxu0 %v48
    %308 = vmatprep.subr.mxu0 0.0
    %309 = vmatpush1.msra.mxu0 %v49
    %310 = vmatprep.subr.mxu0 0.0
    %311 = vmatpush1.msra.mxu0 %v50
    %312 = vmatprep.subr.mxu0 0.0
    %313 = vmatpush1.msra.mxu0 %v51
    %314 = vmatprep.subr.mxu0 0.0
    %315 = vmatpush1.msra.mxu0 %v52
    %316 = vmatprep.subr.mxu0 0.0
    %317 = vmatpush1.msra.mxu0 0.0
    %318 = vmatprep.subr.mxu0 0.0
    %319 = vmatpush1.msra.mxu0 0.0
    %320 = vmatprep.subr.mxu0 0.0
    %321 = vmatpush1.msra.mxu0 0.0
    %322 = vmatprep.subr.mxu0 0.0
    %323 = vmatpush1.msra.mxu0 0.0
    %324 = vmatprep.subr.mxu0 0.0
    %325 = vmatpush1.msra.mxu0 0.0
    %326 = vmatprep.subr.mxu0 0.0
    %327 = vmatpush1.msra.mxu0 0.0
    %328 = vmatprep.subr.mxu0 0.0
    %329 = vmatpush1.msra.mxu0 0.0
    %330 = vmatprep.subr.mxu0 0.0
    %331 = vmatpush1.msra.mxu0 0.0
    %332 = vmatprep.subr.mxu0 0.0
    %333 = vmatpush1.msra.mxu0 0.0
    %334 = vmatprep.subr.mxu0 0.0
    %335 = vmatpush1.msra.mxu0 0.0
    %336 = vmatprep.subr.mxu0 0.0
    %337 = vmatpush1.msra.mxu0 0.0
    %338 = vmatprep.subr.mxu0 0.0
    %339 = vmatpush1.msra.mxu0 0.0
    %340 = vmatprep.subr.mxu0 0.0
    %341 = vmatpush1.msra.mxu0 0.0
    %342 = vmatprep.subr.mxu0 0.0
    %343 = vmatpush1.msra.mxu0 0.0
    %344 = vmatprep.subr.mxu0 0.0
    %345 = vmatpush1.msra.mxu0 0.0
    %346 = vmatprep.subr.mxu0 0.0
    %347 = vmatpush1.msra.mxu0 0.0
    %348 = vmatprep.mubr.f32.mxu0 0.0
    %349 = vmatmul.mubr.f32.gmra.mrb[0].mxu0 %v282
    %v350 = vpop.f32.mrb[0].mxu0
    %v351 = vadd.f32 0.0, %v350
    %v352 = vpop.f32.mrb[0].mxu0
    %353 = vdwg.mxu0
    %v354 = vmul.f32 %v351, 0.001953125
    %v355 = vadd.f32 %v354, 1e-05
    %v356 = vrsqrt.pop %v355
    %v358 = vsel %vm147, %v356, 0
    %360 = vmatprep.subr.mxu0 0.0
    %361 = vmatpush1.msra.mxu0 %v153
    %362 = vmatprep.subr.mxu0 0.0
    %363 = vmatpush1.msra.mxu0 0.0
    %364 = vmatprep.subr.mxu0 0.0
    %365 = vmatpush1.msra.mxu0 0.0
    %366 = vmatprep.subr.mxu0 0.0
    %367 = vmatpush1.msra.mxu0 0.0
    %368 = vmatprep.subr.mxu0 0.0
    %369 = vmatpush1.msra.mxu0 0.0
    %370 = vmatprep.subr.mxu0 0.0
    %371 = vmatpush1.msra.mxu0 0.0
    %372 = vmatprep.subr.mxu0 0.0
    %373 = vmatpush1.msra.mxu0 0.0
    %374 = vmatprep.subr.mxu0 0.0
    %375 = vmatpush1.msra.mxu0 0.0
    %376 = vmatprep.subr.mxu0 0.0
    %377 = vmatpush1.msra.mxu0 0.0
    %378 = vmatprep.subr.mxu0 0.0
    %379 = vmatpush1.msra.mxu0 0.0
    %380 = vmatprep.subr.mxu0 0.0
    %381 = vmatpush1.msra.mxu0 0.0
    %382 = vmatprep.subr.mxu0 0.0
    %383 = vmatpush1.msra.mxu0 0.0
    %384 = vmatprep.subr.mxu0 0.0
    %385 = vmatpush1.msra.mxu0 0.0
    %386 = vmatprep.subr.mxu0 0.0
    %387 = vmatpush1.msra.mxu0 0.0
    %388 = vmatprep.subr.mxu0 0.0
    %389 = vmatpush1.msra.mxu0 0.0
    %390 = vmatprep.subr.mxu0 0.0
    %391 = vmatpush1.msra.mxu0 0.0
    %392 = vmatprep.subr.mxu0 0.0
    %393 = vmatpush1.msra.mxu0 0.0
    %394 = vmatprep.subr.mxu0 0.0
    %395 = vmatpush1.msra.mxu0 0.0
    %396 = vmatprep.subr.mxu0 0.0
    %397 = vmatpush1.msra.mxu0 0.0
    %398 = vmatprep.subr.mxu0 0.0
    %399 = vmatpush1.msra.mxu0 0.0
    %400 = vmatprep.subr.mxu0 0.0
    %401 = vmatpush1.msra.mxu0 0.0
    %402 = vmatprep.subr.mxu0 0.0
    %403 = vmatpush1.msra.mxu0 0.0
    %404 = vmatprep.subr.mxu0 0.0
    %405 = vmatpush1.msra.mxu0 0.0
    %406 = vmatprep.subr.mxu0 0.0
    %407 = vmatpush1.msra.mxu0 0.0
    %408 = vmatprep.subr.mxu0 0.0
    %409 = vmatpush1.msra.mxu0 0.0
    %410 = vmatprep.subr.mxu0 0.0
    %411 = vmatpush1.msra.mxu0 0.0
    %412 = vmatprep.subr.mxu0 0.0
    %413 = vmatpush1.msra.mxu0 0.0
    %414 = vmatprep.subr.mxu0 0.0
    %415 = vmatpush1.msra.mxu0 0.0
    %416 = vmatprep.subr.mxu0 0.0
    %417 = vmatpush1.msra.mxu0 0.0
    %418 = vmatprep.subr.mxu0 0.0
    %419 = vmatpush1.msra.mxu0 0.0
    %420 = vmatprep.subr.mxu0 0.0
    %421 = vmatpush1.msra.mxu0 0.0
    %422 = vmatprep.subr.mxu0 0.0
    %423 = vmatpush1.msra.mxu0 0.0
    %424 = vmatprep.mubr.f32.mxu0 0.0
    %425 = vmatmul.mubr.f32.gmra.mrb[0].mxu0 %v358
    %v426 = vpop.f32.mrb[0].mxu0
    %v427 = vadd.f32 0.0, %v426
    %v428 = vpop.f32.mrb[0].mxu0
    %429 = vdwg.mxu0
    %v430 = vlaneseq
    %v431 = vshrl.u32 %v430, 7
    %v432 = vsub.s32 0, %v431
    %v433 = vrot.slane %v34, %v432
    %v434 = vmul.f32 %v433, %v427
    %v437 = vunpack.c.l.s4 1966171168
    %v438 = vunpack.c.0.s8 %v437
    %v439 = vlaneseq
    %v440 = vshrl.u32 %v439, 7
    %v441 = vsub.s32 %v438, %v440
    %v442 = vrot.slane %v434, %v441
    %v443 = vcombine.high %v442, %v442
    %v445 = vunpack.c.l.s4 1966171168
    %v446 = vunpack.c.0.s8 %v445
    %v447 = vlaneseq
    %v448 = vshrl.u32 %v447, 7
    %v449 = vsub.s32 %v446, %v448
    %v450 = vrot.slane %v442, %v449
    %v452 = vunpack.c.l.s4 1966171168
    %v453 = vunpack.c.0.s8 %v452
    %v454 = vlaneseq
    %v455 = vshrl.u32 %v454, 7
    %v456 = vsub.s32 %v453, %v455
    %v457 = vrot.slane %v443, %v456
    %v458 = vlaneseq
    %v459 = vshrl.u32 %v458, 7
    %v460 = vsub.s32 0, %v459
    %v461 = vrot.slane %v450, %v460
    %v462 = vlaneseq
    %v463 = vshrl.u32 %v462, 7
    %v464 = vsub.s32 0, %v463
    %v465 = vrot.slane %v457, %v464
    %v468 = vmul.f32 %v258, %v461
    %v469 = vmul.f32 %v259, %v461
    %v470 = vmul.f32 %v260, %v465
    %v471 = vmul.f32 %v261, %v465
    %v472 = vlaneseq
    %v473 = vshrl.u32 %v472, 7
    %v474 = vsub.s32 0, %v473
    %v475 = vrot.slane %v35, %v474
    %v476 = vadd.f32 %v468, %v475
    %v477 = vadd.f32 %v469, %v475
    %v478 = vadd.f32 %v470, %v475
    %v479 = vadd.f32 %v471, %v475
    %v480 = vxor.u32 %v476, 2147483648
    %v481 = vxor.u32 %v477, 2147483648
    %v482 = vxor.u32 %v478, 2147483648
    %v483 = vxor.u32 %v479, 2147483648
    %v484 = vmul.f32 %v480, 1.442695
    %v485 = vpow.pop %v484
    %v486 = vmul.f32 %v481, 1.442695
    %v487 = vpow.pop %v486
    %v488 = vmul.f32 %v482, 1.442695
    %v489 = vpow.pop %v488
    %v490 = vmul.f32 %v483, 1.442695
    %v491 = vpow.pop %v490
    %v492 = vadd.f32 %v485, 1.0
    %v493 = vadd.f32 %v487, 1.0
    %v494 = vadd.f32 %v489, 1.0
    %v495 = vadd.f32 %v491, 1.0
    %v496 = vrcp.pop %v492
    %v497 = vmul.f32 1.0, %v496
    %v498 = vrcp.pop %v493
    %v499 = vmul.f32 1.0, %v498
    %v500 = vrcp.pop %v494
    %v501 = vmul.f32 1.0, %v500
    %v502 = vrcp.pop %v495
    %v503 = vmul.f32 1.0, %v502
    %v504 = vmul.f32 %v476, %v497
    %v505 = vmul.f32 %v477, %v499
    %v506 = vmul.f32 %v478, %v501
    %v507 = vmul.f32 %v479, %v503
    %v508 = vrot.slane %v504, 7
    %v509 = vrot.slane %v505, 7
    %v510 = vrot.slane %v506, 7
    %v511 = vrot.slane %v507, 7
    %v512 = vlaneseq
    %v513 = vshrl.u32 %v512, 7
    %vm514 = vcmp.lt.s32.totalorder %v513, 1
    %v515 = vsel %vm514, %v510, %v511
    %v516 = vsel %vm514, %v509, %v510
    %v517 = vsel %vm514, %v508, %v509
    %v518 = vsel %vm514, %v511, %v508
    %v519 = vrot.slane %v504, 1
    %v520 = vrot.slane %v505, 1
    %v521 = vrot.slane %v506, 1
    %v522 = vrot.slane %v507, 1
    %vm523 = vcmp.lt.s32.totalorder %v513, 7
    %v524 = vsel %vm523, %v521, %v522
    %v525 = vsel %vm523, %v520, %v521
    %v526 = vsel %vm523, %v519, %v520
    %v527 = vsel %vm523, %v522, %v519
    %v528 = vadd.s32 %v513, 8
    %v529 = vadd.s32 %v513, 16
    %v530 = vadd.s32 %v513, 24
    %vm531 = vcmp.lt.s32.totalorder %v513, 0
    %v532 = vsub.s32 0, %v513
    %v533 = vsel %vm531, %v532, %v513
    %v534 = vshrl.u32 %v533, 4
    %v535 = vand.u32 %v533, 15
    %v536 = vsub.s32 0, %v535
    %v537 = vsel %vm531, %v536, %v535
    %vm538 = vcmp.lt.s32.totalorder %v528, 0
    %v539 = vsub.s32 0, %v528
    %v540 = vsel %vm538, %v539, %v528
    %v541 = vshrl.u32 %v540, 4
    %v542 = vand.u32 %v540, 15
    %v543 = vsub.s32 0, %v542
    %v544 = vsel %vm538, %v543, %v542
    %vm545 = vcmp.lt.s32.totalorder %v529, 0
    %v546 = vsub.s32 0, %v529
    %v547 = vsel %vm545, %v546, %v529
    %v548 = vshrl.u32 %v547, 4
    %v549 = vand.u32 %v547, 15
    %v550 = vsub.s32 0, %v549
    %v551 = vsel %vm545, %v550, %v549
    %vm552 = vcmp.lt.s32.totalorder %v530, 0
    %v553 = vsub.s32 0, %v530
    %v554 = vsel %vm552, %v553, %v530
    %v555 = vshrl.u32 %v554, 4
    %v556 = vand.u32 %v554, 15
    %v557 = vsub.s32 0, %v556
    %v558 = vsel %vm552, %v557, %v556
    %vm559 = vcmp.ne.s32.totalorder %v537, 0
    %vm560 = vcmp.ne.s32.totalorder %v544, 0
    %vm561 = vcmp.ne.s32.totalorder %v551, 0
    %vm562 = vcmp.ne.s32.totalorder %v558, 0
    %vm563 = vcmp.lt.s32.totalorder %v537, 0
    %vm564 = vcmp.lt.s32.totalorder %v544, 0
    %vm565 = vcmp.lt.s32.totalorder %v551, 0
    %vm566 = vcmp.lt.s32.totalorder %v558, 0
    %vm567 = vmand %vm563, %vm559
    %vm568 = vmand %vm564, %vm560
    %vm569 = vmand %vm565, %vm561
    %vm570 = vmand %vm566, %vm562
    %v571 = vadd.s32 %v537, 16
    %v572 = vadd.s32 %v544, 16
    %v573 = vadd.s32 %v551, 16
    %v574 = vadd.s32 %v558, 16
    %v575 = vsel %vm567, %v571, %v537
    %v576 = vsel %vm568, %v572, %v544
    %v577 = vsel %vm569, %v573, %v551
    %v578 = vsel %vm570, %v574, %v558
    %vm579 = vcmp.eq.s32.totalorder %v575, 0
    %vm580 = vcmp.eq.s32.totalorder %v576, 0
    %vm581 = vcmp.eq.s32.totalorder %v577, 0
    %vm582 = vcmp.eq.s32.totalorder %v578, 0
    %v583 = vsel %vm579, 0.0, %v518
    %v584 = vsel %vm580, 0.0, %v517
    %v585 = vsel %vm581, 0.0, %v516
    %v586 = vsel %vm582, 0.0, %v515
    %vm587 = vcmp.eq.s32.totalorder %v575, 15
    %vm588 = vcmp.eq.s32.totalorder %v576, 15
    %vm589 = vcmp.eq.s32.totalorder %v577, 15
    %vm590 = vcmp.eq.s32.totalorder %v578, 15
    %v591 = vsel %vm587, 0.0, %v526
    %v592 = vsel %vm588, 0.0, %v525
    %v593 = vsel %vm589, 0.0, %v524
    %v594 = vsel %vm590, 0.0, %v527
    %v595 = vpack.c.bf16 %v584, %v583
    %v596 = vpack.c.bf16 %v505, %v504
    %v597 = vpack.c.bf16 %v592, %v591
    %v598 = vpack.c.bf16 %v586, %v585
    %v599 = vpack.c.bf16 %v507, %v506
    %v600 = vpack.c.bf16 %v594, %v593
    %v601 = vld [vmem:[#allocation2] sm:$0xf]
    %v602 = vld [vmem:[#allocation2 + $0x4] sm:$0xf]
    %v603 = vld [vmem:[#allocation2 + $0x8] sm:$0xf]
    %v604 = vld [vmem:[#allocation2 + $0xc] sm:$0xf]
    %v605 = vld [vmem:[#allocation2 + $0x10] sm:$0xf]
    %v606 = vld [vmem:[#allocation2 + $0x14] sm:$0xf]
    %v607 = vld [vmem:[#allocation2 + $0x18] sm:$0xf]
    %v608 = vld [vmem:[#allocation2 + $0x1c] sm:$0xf]
    %v609 = vld [vmem:[#allocation2 + $0x20] sm:$0xf]
    %v610 = vld [vmem:[#allocation2 + $0x24] sm:$0xf]
    %v611 = vld [vmem:[#allocation2 + $0x28] sm:$0xf]
    %v612 = vld [vmem:[#allocation2 + $0x2c] sm:$0xf]
    %v613 = vld [vmem:[#allocation2 + $0x30] sm:$0xf]
    %v614 = vld [vmem:[#allocation2 + $0x34] sm:$0xf]
    %v615 = vld [vmem:[#allocation2 + $0x38] sm:$0xf]
    %v616 = vld [vmem:[#allocation2 + $0x3c] sm:$0xf]
    %v617 = vld [vmem:[#allocation2 + $0x40] sm:$0xf]
    %v618 = vld [vmem:[#allocation2 + $0x44] sm:$0xf]
    %v619 = vld [vmem:[#allocation2 + $0x48] sm:$0xf]
    %v620 = vld [vmem:[#allocation2 + $0x4c] sm:$0xf]
    %v621 = vld [vmem:[#allocation2 + $0x50] sm:$0xf]
    %v622 = vld [vmem:[#allocation2 + $0x54] sm:$0xf]
    %v623 = vld [vmem:[#allocation2 + $0x58] sm:$0xf]
    %v624 = vld [vmem:[#allocation2 + $0x5c] sm:$0xf]
    %v625 = vld [vmem:[#allocation2 + $0x60] sm:$0xf]
    %v626 = vld [vmem:[#allocation2 + $0x64] sm:$0xf]
    %v627 = vld [vmem:[#allocation2 + $0x68] sm:$0xf]
    %v628 = vld [vmem:[#allocation2 + $0x6c] sm:$0xf]
    %v629 = vld [vmem:[#allocation2 + $0x70] sm:$0xf]
    %v630 = vld [vmem:[#allocation2 + $0x74] sm:$0xf]
    %v631 = vld [vmem:[#allocation2 + $0x78] sm:$0xf]
    %v632 = vld [vmem:[#allocation2 + $0x7c] sm:$0xf]
    %v633 = vld [vmem:[#allocation2 + $0x80] sm:$0xf]
    %v634 = vld [vmem:[#allocation2 + $0x84] sm:$0xf]
    %v635 = vld [vmem:[#allocation2 + $0x88] sm:$0xf]
    %v636 = vld [vmem:[#allocation2 + $0x8c] sm:$0xf]
    %v637 = vld [vmem:[#allocation2 + $0x90] sm:$0xf]
    %v638 = vld [vmem:[#allocation2 + $0x94] sm:$0xf]
    %v639 = vld [vmem:[#allocation2 + $0x98] sm:$0xf]
    %v640 = vld [vmem:[#allocation2 + $0x9c] sm:$0xf]
    %v641 = vld [vmem:[#allocation2 + $0xa0] sm:$0xf]
    %v642 = vld [vmem:[#allocation2 + $0xa4] sm:$0xf]
    %v643 = vld [vmem:[#allocation2 + $0xa8] sm:$0xf]
    %v644 = vld [vmem:[#allocation2 + $0xac] sm:$0xf]
    %v645 = vld [vmem:[#allocation2 + $0xb0] sm:$0xf]
    %v646 = vld [vmem:[#allocation2 + $0xb4] sm:$0xf]
    %v647 = vld [vmem:[#allocation2 + $0xb8] sm:$0xf]
    %v648 = vld [vmem:[#allocation2 + $0xbc] sm:$0xf]
    %v649 = vlaneseq
    %v650 = vshrl.u32 %v649, 7
    %v651 = vsub.s32 0, %v650
    %v652 = vrot.slane %v36, %v651
    %v701 = vunpack.c.l.b16 %v601
    %v702 = vunpack.c.l.b16 %v602
    %v703 = vunpack.c.l.b16 %v603
    %v704 = vunpack.c.l.b16 %v604
    %v705 = vunpack.c.l.b16 %v605
    %v706 = vunpack.c.l.b16 %v606
    %v707 = vunpack.c.l.b16 %v607
    %v708 = vunpack.c.l.b16 %v608
    %v709 = vunpack.c.l.b16 %v609
    %v710 = vunpack.c.l.b16 %v610
    %v711 = vunpack.c.l.b16 %v611
    %v712 = vunpack.c.l.b16 %v612
    %v713 = vunpack.c.l.b16 %v613
    %v714 = vunpack.c.l.b16 %v614
    %v715 = vunpack.c.l.b16 %v615
    %v716 = vunpack.c.l.b16 %v616
    %v717 = vunpack.c.l.b16 %v617
    %v718 = vunpack.c.l.b16 %v618
    %v719 = vunpack.c.l.b16 %v619
    %v720 = vunpack.c.l.b16 %v620
    %v721 = vunpack.c.l.b16 %v621
    %v722 = vunpack.c.l.b16 %v622
    %v723 = vunpack.c.l.b16 %v623
    %v724 = vunpack.c.l.b16 %v624
    %v725 = vunpack.c.l.b16 %v625
    %v726 = vunpack.c.l.b16 %v626
    %v727 = vunpack.c.l.b16 %v627
    %v728 = vunpack.c.l.b16 %v628
    %v729 = vunpack.c.l.b16 %v629
    %v730 = vunpack.c.l.b16 %v630
    %v731 = vunpack.c.l.b16 %v631
    %v732 = vunpack.c.l.b16 %v632
    %v733 = vunpack.c.l.b16 %v633
    %v734 = vunpack.c.l.b16 %v634
    %v735 = vunpack.c.l.b16 %v635
    %v736 = vunpack.c.l.b16 %v636
    %v737 = vunpack.c.l.b16 %v637
    %v738 = vunpack.c.l.b16 %v638
    %v739 = vunpack.c.l.b16 %v639
    %v740 = vunpack.c.l.b16 %v640
    %v741 = vunpack.c.l.b16 %v641
    %v742 = vunpack.c.l.b16 %v642
    %v743 = vunpack.c.l.b16 %v643
    %v744 = vunpack.c.l.b16 %v644
    %v745 = vunpack.c.l.b16 %v645
    %v746 = vunpack.c.l.b16 %v646
    %v747 = vunpack.c.l.b16 %v647
    %v748 = vunpack.c.l.b16 %v648
    %v749 = vpack.c.b16 %v702, %v701
    %v750 = vpack.c.b16 %v704, %v703
    %v751 = vpack.c.b16 %v706, %v705
    %v752 = vpack.c.b16 %v708, %v707
    %v753 = vpack.c.b16 %v710, %v709
    %v754 = vpack.c.b16 %v712, %v711
    %v755 = vpack.c.b16 %v714, %v713
    %v756 = vpack.c.b16 %v716, %v715
    %v757 = vpack.c.b16 %v718, %v717
    %v758 = vpack.c.b16 %v720, %v719
    %v759 = vpack.c.b16 %v722, %v721
    %v760 = vpack.c.b16 %v724, %v723
    %v761 = vpack.c.b16 %v726, %v725
    %v762 = vpack.c.b16 %v728, %v727
    %v763 = vpack.c.b16 %v730, %v729
    %v764 = vpack.c.b16 %v732, %v731
    %v765 = vpack.c.b16 %v734, %v733
    %v766 = vpack.c.b16 %v736, %v735
    %v767 = vpack.c.b16 %v738, %v737
    %v768 = vpack.c.b16 %v740, %v739
    %v769 = vpack.c.b16 %v742, %v741
    %v770 = vpack.c.b16 %v744, %v743
    %v771 = vpack.c.b16 %v746, %v745
    %v772 = vpack.c.b16 %v748, %v747
    %797 = vmatprep.subr.bf16.mxu0 0
    %798 = vmatpush1.bf16.msra.mxu0 %v749
    %799 = vmatprep.subr.bf16.mxu0 0
    %800 = vmatpush1.bf16.msra.mxu0 %v750
    %801 = vmatprep.subr.bf16.mxu0 0
    %802 = vmatpush1.bf16.msra.mxu0 %v751
    %803 = vmatprep.subr.bf16.mxu0 0
    %804 = vmatpush1.bf16.msra.mxu0 %v752
    %805 = vmatprep.subr.bf16.mxu0 0
    %806 = vmatpush1.bf16.msra.mxu0 %v753
    %807 = vmatprep.subr.bf16.mxu0 0
    %808 = vmatpush1.bf16.msra.mxu0 %v754
    %809 = vmatprep.subr.bf16.mxu0 0
    %810 = vmatpush1.bf16.msra.mxu0 %v755
    %811 = vmatprep.subr.bf16.mxu0 0
    %812 = vmatpush1.bf16.msra.mxu0 %v756
    %813 = vmatprep.subr.bf16.mxu0 0
    %814 = vmatpush1.bf16.msra.mxu0 %v757
    %815 = vmatprep.subr.bf16.mxu0 0
    %816 = vmatpush1.bf16.msra.mxu0 %v758
    %817 = vmatprep.subr.bf16.mxu0 0
    %818 = vmatpush1.bf16.msra.mxu0 %v759
    %819 = vmatprep.subr.bf16.mxu0 0
    %820 = vmatpush1.bf16.msra.mxu0 %v760
    %821 = vmatprep.subr.bf16.mxu0 0
    %822 = vmatpush1.bf16.msra.mxu0 %v761
    %823 = vmatprep.subr.bf16.mxu0 0
    %824 = vmatpush1.bf16.msra.mxu0 %v762
    %825 = vmatprep.subr.bf16.mxu0 0
    %826 = vmatpush1.bf16.msra.mxu0 %v763
    %827 = vmatprep.subr.bf16.mxu0 0
    %828 = vmatpush1.bf16.msra.mxu0 %v764
    %829 = vmatprep.mubr.bf16.mxu0 %v596
    %830 = vmatmul.mubr.bf16.gmra.mrb[0].mxu0 %v595
    %v831 = vpop.f32.mrb[0].mxu0
    %v832 = vadd.f32 %v652, %v831
    %v833 = vpop.f32.mrb[0].mxu0
    %v834 = vpop.f32.mrb[0].mxu0
    %v835 = vadd.f32 %v652, %v834
    %v836 = vpop.f32.mrb[0].mxu0
    %837 = vmatprep.mubr.bf16.mxu0 %v599
    %838 = vmatmul.mubr.bf16.gmra.mrb[0].mxu0 %v598
    %v839 = vpop.f32.mrb[0].mxu0
    %v840 = vadd.f32 %v652, %v839
    %v841 = vpop.f32.mrb[0].mxu0
    %v842 = vpop.f32.mrb[0].mxu0
    %v843 = vadd.f32 %v652, %v842
    %v844 = vpop.f32.mrb[0].mxu0
    %845 = vdwg.mxu0
    %846 = vmatprep.subr.bf16.mxu0 0
    %847 = vmatpush1.bf16.msra.mxu0 %v765
    %848 = vmatprep.subr.bf16.mxu0 0
    %849 = vmatpush1.bf16.msra.mxu0 %v766
    %850 = vmatprep.subr.bf16.mxu0 0
    %851 = vmatpush1.bf16.msra.mxu0 %v767
    %852 = vmatprep.subr.bf16.mxu0 0
    %853 = vmatpush1.bf16.msra.mxu0 %v768
    %854 = vmatprep.subr.bf16.mxu0 0
    %855 = vmatpush1.bf16.msra.mxu0 %v769
    %856 = vmatprep.subr.bf16.mxu0 0
    %857 = vmatpush1.bf16.msra.mxu0 %v770
    %858 = vmatprep.subr.bf16.mxu0 0
    %859 = vmatpush1.bf16.msra.mxu0 %v771
    %860 = vmatprep.subr.bf16.mxu0 0
    %861 = vmatpush1.bf16.msra.mxu0 %v772
    %862 = vmatprep.subr.bf16.mxu0 0
    %863 = vmatpush1.bf16.msra.mxu0 0
    %864 = vmatprep.subr.bf16.mxu0 0
    %865 = vmatpush1.bf16.msra.mxu0 0
    %866 = vmatprep.subr.bf16.mxu0 0
    %867 = vmatpush1.bf16.msra.mxu0 0
    %868 = vmatprep.subr.bf16.mxu0 0
    %869 = vmatpush1.bf16.msra.mxu0 0
    %870 = vmatprep.subr.bf16.mxu0 0
    %871 = vmatpush1.bf16.msra.mxu0 0
    %872 = vmatprep.subr.bf16.mxu0 0
    %873 = vmatpush1.bf16.msra.mxu0 0
    %874 = vmatprep.subr.bf16.mxu0 0
    %875 = vmatpush1.bf16.msra.mxu0 0
    %876 = vmatprep.subr.bf16.mxu0 0
    %877 = vmatpush1.bf16.msra.mxu0 0
    %878 = vmatprep.mubr.bf16.mxu0 0
    %879 = vmatmul.mubr.bf16.gmra.mrb[0].mxu0 %v597
    %v880 = vpop.f32.mrb[0].mxu0
    %v881 = vadd.f32 %v832, %v880
    %v882 = vpop.f32.mrb[0].mxu0
    %v883 = vpop.f32.mrb[0].mxu0
    %v884 = vadd.f32 %v835, %v883
    %v885 = vpop.f32.mrb[0].mxu0
    %886 = vmatprep.mubr.bf16.mxu0 0
    %887 = vmatmul.mubr.bf16.gmra.mrb[0].mxu0 %v600
    %v888 = vpop.f32.mrb[0].mxu0
    %v889 = vadd.f32 %v840, %v888
    %v890 = vpop.f32.mrb[0].mxu0
    %v891 = vpop.f32.mrb[0].mxu0
    %v892 = vadd.f32 %v843, %v891
    %v893 = vpop.f32.mrb[0].mxu0
    %894 = vdwg.mxu0
    %895 = vst [vmem:[#allocation5] sm:$0xff] %v881
    %896 = vst [vmem:[#allocation5 + $0x8] sm:$0xff] %v884
    %897 = vst [vmem:[#allocation5 + $0x10] sm:$0xff] %v889
    %898 = vst [vmem:[#allocation5 + $0x18] sm:$0xff] %v892
    // Predicated region
    $region22: #{tpu_custom_call.1} parent=1 // pred_check
      _
    $region23: #{tpu_custom_call.1} parent=1 // pred_check_branch
      %900 = sbr.rel (0) target = $region25
    $region24: #{tpu_custom_call.1} parent=1 // pred_region
      %s902 = ssub.s32 512, 512
      %903 = vsyncadd [#allocation4], %s902
      %s904 = sshll.u32 [#allocation5], 4
      %s905 = int_to_ptr.vmem [resolvable:$true] %s904
      %910 = dma.vmem_to_hbm [thread:$0]  %s905, 512, %s4, [#allocation4], 128, 128, 8
    $region25: #{tpu_custom_call.1} parent=1 // pred_fallthru
      _
    // Predicated region
    $region26: #{tpu_custom_call.1} parent=1 // pred_check
      _
    $region27: #{tpu_custom_call.1} parent=1 // pred_check_branch
      %912 = sbr.rel (0) target = $region29
    $region28: #{tpu_custom_call.1} parent=1 // pred_region
      %913 = dma.done [#allocation4], 512
    $region29: #{tpu_custom_call.1} parent=1 // pred_fallthru
      _
    %914 = vsyncpa [#allocation3], 1
    %915 = vsyncpa [#allocation4], 1

</llo_original>
